<compile_context>
chip_gen: v7x
topology: tpu7x:2x2x1
jax: 0.10.0
libtpu: 0.0.40
codegen_flags: <defaults>
</compile_context>

<pallas_src>
import functools

import jax
import jax.numpy as jnp
from jax.experimental import pallas as pl
from jax.experimental.pallas import tpu as pltpu


def _round_up(x, m):
    return (x + m - 1) // m * m


def _cdiv(a, b):
    return (a + b - 1) // b


def mlp_d_kernel(x_ref, w1_ref, w2_ref, w3_ref, w4_ref, b_ref, out_ref):
    """Fused 4-layer MLP: (Linear->ReLU) x3 -> Linear, bf16 MXU / f32 accum."""
    ndf = w1_ref.shape[1]
    out_pad = w4_ref.shape[1]

    # f32 -> bf16 cast on the VPU (avoids a wrapper-side HBM pad/cast pass).
    x = x_ref[...].astype(jnp.bfloat16)

    h = jnp.dot(x, w1_ref[...], preferred_element_type=jnp.float32)
    h = jnp.maximum(h + b_ref[0:1, :ndf], 0.0).astype(jnp.bfloat16)

    h = jnp.dot(h, w2_ref[...], preferred_element_type=jnp.float32)
    h = jnp.maximum(h + b_ref[1:2, :ndf], 0.0).astype(jnp.bfloat16)

    h = jnp.dot(h, w3_ref[...], preferred_element_type=jnp.float32)
    h = jnp.maximum(h + b_ref[2:3, :ndf], 0.0).astype(jnp.bfloat16)

    out = jnp.dot(h, w4_ref[...], preferred_element_type=jnp.float32)
    out_ref[...] = (out + b_ref[3:4, :out_pad]).astype(out_ref.dtype)


def init_mlp_d_params(key, isize, nc, ndf):
    """PyTorch-style uniform(-1/sqrt(fan_in), 1/sqrt(fan_in)) init.

    Weights are returned already transposed to (in_features, out_features).
    Biases are (1, out_features). Kept at the *original* (unpadded) sizes; the
    wrapper handles any padding / bf16 casting.
    """
    d_in = nc * isize * isize
    dims = [(d_in, ndf), (ndf, ndf), (ndf, ndf), (ndf, 1)]
    params = []
    for fan_in, fan_out in dims:
        key, kw, kb = jax.random.split(key, 3)
        bound = 1.0 / (fan_in ** 0.5)
        w = jax.random.uniform(kw, (fan_in, fan_out), jnp.float32, -bound, bound)
        b = jax.random.uniform(kb, (1, fan_out), jnp.float32, -bound, bound)
        params += [w, b]
    return tuple(params)


@functools.partial(jax.jit, static_argnames=("tb",))
def mlp_d_forward(x, params, *, tb=512):
    """x: (B, nc, isize, isize) float32, NCHW. Returns (B, 1) f32 scores."""
    B = x.shape[0]
    w1, b1, w2, b2, w3, b3, w4, b4 = params
    d_in, ndf = w1.shape
    n_out = w4.shape[1]

    out_pad = _round_up(max(n_out, 1), 128)   # lane-dense output store
    bwidth = max(ndf, out_pad)                # width of the stacked-bias operand

    # Flatten NCHW exactly like torch .view(B, C*H*W). Stays f32; bf16 cast
    # happens inside the kernel.
    x_flat = x.reshape(B, -1)

    # Pad only tiny batches up to one full sublane group (8 rows). Larger
    # ragged batches are handled by Pallas partial edge blocks.
    bp = max(B, 8)
    if bp != B:
        x_flat = jnp.pad(x_flat, ((0, bp - B), (0, 0)))

    # Batch tile: as large as possible (per-grid-step overhead dominates tiny
    # tiles), but always >=2 balanced tiles for mid/large batches so v7x's
    # second TensorCore gets work via the "parallel" grid axis.
    tb = max(8, _round_up(tb, 8))
    if bp <= 16:
        tile_b = bp                                   # single full-extent block
    else:
        tile_b = min(tb, _round_up(_cdiv(bp, 2), 8))  # >=2 tiles, capped at tb
    grid_b = _cdiv(bp, tile_b)

    # Weights: w1/w2/w3 kept at true width (no 128-lane inflation of the
    # dominant w1 fetch); only w4 padded so the output is 128 lanes.
    w1b = w1.astype(jnp.bfloat16)
    w2b = w2.astype(jnp.bfloat16)
    w3b = w3.astype(jnp.bfloat16)
    w4b = jnp.pad(w4, ((0, 0), (0, out_pad - n_out))).astype(jnp.bfloat16)

    # Stack the four biases into one f32 operand (one DMA, not four).
    bstack = jnp.stack(
        [
            jnp.pad(b1[0], (0, bwidth - ndf)),
            jnp.pad(b2[0], (0, bwidth - ndf)),
            jnp.pad(b3[0], (0, bwidth - ndf)),
            jnp.pad(b4[0], (0, bwidth - n_out)),
        ],
        axis=0,
    ).astype(jnp.float32)

    # Explicit VMEM budget (v5e default scoped limit is only 16 MiB).
    est = (
        2 * tile_b * d_in * 4              # x tile, double buffered, f32
        + tile_b * d_in * 2                # in-kernel bf16 copy of x
        + d_in * ndf * 2                   # w1 (single buffered)
        + 2 * ndf * ndf * 2                # w2, w3
        + ndf * out_pad * 2                # w4
        + 4 * bwidth * 4                   # biases
        + 2 * tile_b * out_pad * 2         # out tile, double buffered, bf16
        + 4 * tile_b * max(ndf, out_pad) * 4   # hidden / accumulator temps
    )
    vmem_limit = max(32 << 20, min(int(est * 1.4) + (2 << 20), 128 << 20))

    out_padded = pl.pallas_call(
        mlp_d_kernel,
        out_shape=jax.ShapeDtypeStruct((bp, out_pad), jnp.bfloat16),
        grid=(grid_b,),
        in_specs=[
            pl.BlockSpec((tile_b, d_in), lambda i: (i, 0)),        # x: batch-tiled
            pl.BlockSpec((d_in, ndf), lambda i: (0, 0),
                         pipeline_mode=pl.Buffered(1)),            # w1: resident
            pl.BlockSpec((ndf, ndf), lambda i: (0, 0),
                         pipeline_mode=pl.Buffered(1)),            # w2: resident
            pl.BlockSpec((ndf, ndf), lambda i: (0, 0),
                         pipeline_mode=pl.Buffered(1)),            # w3: resident
            pl.BlockSpec((ndf, out_pad), lambda i: (0, 0),
                         pipeline_mode=pl.Buffered(1)),            # w4: resident
            pl.BlockSpec((4, bwidth), lambda i: (0, 0),
                         pipeline_mode=pl.Buffered(1)),            # biases: resident
        ],
        out_specs=pl.BlockSpec((tile_b, out_pad), lambda i: (i, 0)),
        compiler_params=pltpu.CompilerParams(
            dimension_semantics=("parallel",),
            vmem_limit_bytes=vmem_limit,
        ),
    )(x_flat, w1b, w2b, w3b, w4b, bstack)

    # Real score is column 0 of the lane-padded output; drop any padded rows.
    return out_padded[:B, 0:1].astype(jnp.float32)


def mlp_d_reference(x, params):
    """Pure-JAX f32 reference for correctness checking."""
    B = x.shape[0]
    h = x.reshape(B, -1)
    w1, b1, w2, b2, w3, b3, w4, b4 = params
    h = jnp.maximum(h @ w1 + b1, 0.0)
    h = jnp.maximum(h @ w2 + b2, 0.0)
    h = jnp.maximum(h @ w3 + b3, 0.0)
    return h @ w4 + b4


if __name__ == "__main__":
    B, nc, isize, ndf = 2, 4, 16, 32

    key = jax.random.PRNGKey(0)
    k_params, k_x = jax.random.split(key)
    params = init_mlp_d_params(k_params, isize, nc, ndf)
    x = jax.random.normal(k_x, (B, nc, isize, isize), dtype=jnp.float32)

    out = mlp_d_forward(x, params)
    out = jax.block_until_ready(out)

    ref = mlp_d_reference(x, params)
    assert out.shape == (B, 1), out.shape
    # bf16 weights/activations/output (f32 accumulation) -> loosened tolerance.
    assert jnp.allclose(out, ref, atol=5e-2, rtol=5e-2), (out, ref)

    print("KERNEL_OK")
</pallas_src>

<mosaic_0001>
module attributes {stable_mosaic.version = 11 : i64} {
  func.func @mlp_d_kernel(%arg0: i32, %arg1: memref<8x1024xf32, #tpu.memory_space<vmem>>, %arg2: memref<1024x32xbf16, #tpu.memory_space<vmem>>, %arg3: memref<32x32xbf16, #tpu.memory_space<vmem>>, %arg4: memref<32x32xbf16, #tpu.memory_space<vmem>>, %arg5: memref<32x128xbf16, #tpu.memory_space<vmem>>, %arg6: memref<4x128xf32, #tpu.memory_space<vmem>>, %arg7: memref<8x128xbf16, #tpu.memory_space<vmem>>) attributes {dimension_semantics = [#tpu.dimension_semantics<parallel>], iteration_bounds = array<i64: 1>, scalar_prefetch = 0 : i64, scratch_operands = 0 : i64, tpu.core_type = #tpu.core_type<tc>, window_params = [{transform_indices = @transform_0, window_bounds = array<i64: 8, 1024>}, {pipeline_mode = #tpu.pipeline_mode<synchronous>, transform_indices = @transform_1, window_bounds = array<i64: 1024, 32>}, {pipeline_mode = #tpu.pipeline_mode<synchronous>, transform_indices = @transform_2, window_bounds = array<i64: 32, 32>}, {pipeline_mode = #tpu.pipeline_mode<synchronous>, transform_indices = @transform_3, window_bounds = array<i64: 32, 32>}, {pipeline_mode = #tpu.pipeline_mode<synchronous>, transform_indices = @transform_4, window_bounds = array<i64: 32, 128>}, {pipeline_mode = #tpu.pipeline_mode<synchronous>, transform_indices = @transform_5, window_bounds = array<i64: 4, 128>}, {transform_indices = @transform_6, window_bounds = array<i64: 8, 128>}]} {
    %c0 = arith.constant 0 : index
    %c0_0 = arith.constant 0 : index
    %0 = vector.load %arg1[%c0, %c0_0] : memref<8x1024xf32, #tpu.memory_space<vmem>>, vector<8x1024xf32>
    %1 = arith.truncf %0 : vector<8x1024xf32> to vector<8x1024xbf16>
    %c0_1 = arith.constant 0 : index
    %c0_2 = arith.constant 0 : index
    %2 = vector.load %arg2[%c0_1, %c0_2] : memref<1024x32xbf16, #tpu.memory_space<vmem>>, vector<1024x32xbf16>
    %cst = arith.constant dense<0.000000e+00> : vector<8x32xf32>
    %3 = tpu.matmul %1, %2, %cst {dimension_numbers = #tpu.dot_dimension_numbers<[1], [0], [0], [1], [0, 0, 1, 1], [], []>} : vector<8x1024xbf16>, vector<1024x32xbf16>, vector<8x32xf32> -> vector<8x32xf32>
    %c0_3 = arith.constant 0 : index
    %c0_4 = arith.constant 0 : index
    %4 = vector.load %arg6[%c0_3, %c0_4] : memref<4x128xf32, #tpu.memory_space<vmem>>, vector<1x32xf32>
    %5 = vector.broadcast %4 : vector<1x32xf32> to vector<8x32xf32>
    %6 = arith.addf %3, %5 : vector<8x32xf32>
    %cst_5 = arith.constant 0.000000e+00 : f32
    %7 = vector.broadcast %cst_5 : f32 to vector<8x32xf32>
    %8 = arith.maximumf %6, %7 : vector<8x32xf32>
    %9 = arith.truncf %8 : vector<8x32xf32> to vector<8x32xbf16>
    %c0_6 = arith.constant 0 : index
    %c0_7 = arith.constant 0 : index
    %10 = vector.load %arg3[%c0_6, %c0_7] : memref<32x32xbf16, #tpu.memory_space<vmem>>, vector<32x32xbf16>
    %cst_8 = arith.constant dense<0.000000e+00> : vector<8x32xf32>
    %11 = tpu.matmul %9, %10, %cst_8 {dimension_numbers = #tpu.dot_dimension_numbers<[1], [0], [0], [1], [0, 0, 1, 1], [], []>} : vector<8x32xbf16>, vector<32x32xbf16>, vector<8x32xf32> -> vector<8x32xf32>
    %c1 = arith.constant 1 : index
    %c0_9 = arith.constant 0 : index
    %12 = vector.load %arg6[%c1, %c0_9] : memref<4x128xf32, #tpu.memory_space<vmem>>, vector<1x32xf32>
    %13 = vector.broadcast %12 : vector<1x32xf32> to vector<8x32xf32>
    %14 = arith.addf %11, %13 : vector<8x32xf32>
    %cst_10 = arith.constant 0.000000e+00 : f32
    %15 = vector.broadcast %cst_10 : f32 to vector<8x32xf32>
    %16 = arith.maximumf %14, %15 : vector<8x32xf32>
    %17 = arith.truncf %16 : vector<8x32xf32> to vector<8x32xbf16>
    %c0_11 = arith.constant 0 : index
    %c0_12 = arith.constant 0 : index
    %18 = vector.load %arg4[%c0_11, %c0_12] : memref<32x32xbf16, #tpu.memory_space<vmem>>, vector<32x32xbf16>
    %cst_13 = arith.constant dense<0.000000e+00> : vector<8x32xf32>
    %19 = tpu.matmul %17, %18, %cst_13 {dimension_numbers = #tpu.dot_dimension_numbers<[1], [0], [0], [1], [0, 0, 1, 1], [], []>} : vector<8x32xbf16>, vector<32x32xbf16>, vector<8x32xf32> -> vector<8x32xf32>
    %c2 = arith.constant 2 : index
    %c0_14 = arith.constant 0 : index
    %20 = vector.load %arg6[%c2, %c0_14] : memref<4x128xf32, #tpu.memory_space<vmem>>, vector<1x32xf32>
    %21 = vector.broadcast %20 : vector<1x32xf32> to vector<8x32xf32>
    %22 = arith.addf %19, %21 : vector<8x32xf32>
    %cst_15 = arith.constant 0.000000e+00 : f32
    %23 = vector.broadcast %cst_15 : f32 to vector<8x32xf32>
    %24 = arith.maximumf %22, %23 : vector<8x32xf32>
    %25 = arith.truncf %24 : vector<8x32xf32> to vector<8x32xbf16>
    %c0_16 = arith.constant 0 : index
    %c0_17 = arith.constant 0 : index
    %26 = vector.load %arg5[%c0_16, %c0_17] : memref<32x128xbf16, #tpu.memory_space<vmem>>, vector<32x128xbf16>
    %cst_18 = arith.constant dense<0.000000e+00> : vector<8x128xf32>
    %27 = tpu.matmul %25, %26, %cst_18 {dimension_numbers = #tpu.dot_dimension_numbers<[1], [0], [0], [1], [0, 0, 1, 1], [], []>} : vector<8x32xbf16>, vector<32x128xbf16>, vector<8x128xf32> -> vector<8x128xf32>
    %c3 = arith.constant 3 : index
    %c0_19 = arith.constant 0 : index
    %28 = vector.load %arg6[%c3, %c0_19] : memref<4x128xf32, #tpu.memory_space<vmem>>, vector<1x128xf32>
    %29 = vector.broadcast %28 : vector<1x128xf32> to vector<8x128xf32>
    %30 = arith.addf %27, %29 : vector<8x128xf32>
    %31 = arith.truncf %30 : vector<8x128xf32> to vector<8x128xbf16>
    %c0_20 = arith.constant 0 : index
    %c0_21 = arith.constant 0 : index
    %32 = vector.load %arg7[%c0_20, %c0_21] : memref<8x128xbf16, #tpu.memory_space<vmem>>, vector<8x128xbf16>
    tpu.vector_store %arg7[%c0_20, %c0_21], %31 {strides = array<i32>} : memref<8x128xbf16, #tpu.memory_space<vmem>>, vector<8x128xbf16>,
    return
  }
  func.func @transform_0(%arg0: i32) -> (i32, i32) {
    %c0_i32 = arith.constant 0 : i32
    %c0_i32_0 = arith.constant 0 : i32
    return %arg0, %c0_i32 : i32, i32
  }
  func.func @transform_1(%arg0: i32) -> (i32, i32) {
    %c0_i32 = arith.constant 0 : i32
    %c0_i32_0 = arith.constant 0 : i32
    %c0_i32_1 = arith.constant 0 : i32
    return %c0_i32, %c0_i32_0 : i32, i32
  }
  func.func @transform_2(%arg0: i32) -> (i32, i32) {
    %c0_i32 = arith.constant 0 : i32
    %c0_i32_0 = arith.constant 0 : i32
    %c0_i32_1 = arith.constant 0 : i32
    return %c0_i32, %c0_i32_0 : i32, i32
  }
  func.func @transform_3(%arg0: i32) -> (i32, i32) {
    %c0_i32 = arith.constant 0 : i32
    %c0_i32_0 = arith.constant 0 : i32
    %c0_i32_1 = arith.constant 0 : i32
    return %c0_i32, %c0_i32_0 : i32, i32
  }
  func.func @transform_4(%arg0: i32) -> (i32, i32) {
    %c0_i32 = arith.constant 0 : i32
    %c0_i32_0 = arith.constant 0 : i32
    %c0_i32_1 = arith.constant 0 : i32
    return %c0_i32, %c0_i32_0 : i32, i32
  }
  func.func @transform_5(%arg0: i32) -> (i32, i32) {
    %c0_i32 = arith.constant 0 : i32
    %c0_i32_0 = arith.constant 0 : i32
    %c0_i32_1 = arith.constant 0 : i32
    return %c0_i32, %c0_i32_0 : i32, i32
  }
  func.func @transform_6(%arg0: i32) -> (i32, i32) {
    %c0_i32 = arith.constant 0 : i32
    %c0_i32_0 = arith.constant 0 : i32
    return %arg0, %c0_i32 : i32, i32
  }
}

</mosaic_0001>

<llo_original>
// kernel: mlp_d_forward.1
$region0: #{mlp_d_forward.1}
  #allocation0 [shape = 'u32[]', space=smem, size = 0x4, offset = 0x4, fixed_abs, tag = 'smem constant byte address 0x4 - core index']
  #allocation1 [shape = 'u32[144,128]{1,0:T(1,128)}', space=vmem, size = 0x12000, scoped, tag = 'internal scratch']
  %s0 = inlined_call_operand.vmem [shape: f32[8,1024], index: 0, kind: input, shape index: {}]
  %s1 = inlined_call_operand.vmem [shape: bf16[1024,32], index: 1, kind: input, shape index: {}]
  %s2 = inlined_call_operand.vmem [shape: bf16[32,32], index: 2, kind: input, shape index: {}]
  %s3 = inlined_call_operand.vmem [shape: bf16[32,32], index: 3, kind: input, shape index: {}]
  %s4 = inlined_call_operand.vmem [shape: bf16[32,128], index: 4, kind: input, shape index: {}]
  %s5 = inlined_call_operand.vmem [shape: f32[4,128], index: 5, kind: input, shape index: {}]
  %s6 = inlined_call_operand.vmem [shape: bf16[8,128], index: 6, kind: output, shape index: {}]
  %s7 = sld [smem:[#allocation0]]
  $region34: #{mlp_d_forward.1} parent=0
    _
  %s9 = ssub.s32 1, %s7
  %s10 = scalar_select 0, %s9, %s7
  // Predicated region
  $region2: #{mlp_d_forward.1} parent=0 // pred_check
    _
  $region3: #{mlp_d_forward.1} parent=0 // pred_check_branch
    %12 = sbr.rel (0) target = $region5
  $region4: #{mlp_d_forward.1} parent=0 // pred_region
    _
  $region5: #{mlp_d_forward.1} parent=0 // pred_fallthru
    _
  // Predicated region
  $region6: #{mlp_d_forward.1} parent=0 // pred_check
    _
  $region7: #{mlp_d_forward.1} parent=0 // pred_check_branch
    %14 = sbr.rel (0) target = $region9
  $region8: #{mlp_d_forward.1} parent=0 // pred_region
    _
  $region9: #{mlp_d_forward.1} parent=0 // pred_fallthru
    _
  // Predicated region
  $region10: #{mlp_d_forward.1} parent=0 // pred_check
    _
  $region11: #{mlp_d_forward.1} parent=0 // pred_check_branch
    %16 = sbr.rel (0) target = $region13
  $region12: #{mlp_d_forward.1} parent=0 // pred_region
    _
  $region13: #{mlp_d_forward.1} parent=0 // pred_fallthru
    _
  // Predicated region
  $region14: #{mlp_d_forward.1} parent=0 // pred_check
    _
  $region15: #{mlp_d_forward.1} parent=0 // pred_check_branch
    %18 = sbr.rel (0) target = $region17
  $region16: #{mlp_d_forward.1} parent=0 // pred_region
    _
  $region17: #{mlp_d_forward.1} parent=0 // pred_fallthru
    _
  // Predicated region
  $region18: #{mlp_d_forward.1} parent=0 // pred_check
    _
  $region19: #{mlp_d_forward.1} parent=0 // pred_check_branch
    %20 = sbr.rel (0) target = $region21
  $region20: #{mlp_d_forward.1} parent=0 // pred_region
    _
  $region21: #{mlp_d_forward.1} parent=0 // pred_fallthru
    _
  // Predicated region
  $region22: #{mlp_d_forward.1} parent=0 // pred_check
    _
  $region23: #{mlp_d_forward.1} parent=0 // pred_check_branch
    %22 = sbr.rel (0) target = $region25
  $region24: #{mlp_d_forward.1} parent=0 // pred_region
    _
  $region25: #{mlp_d_forward.1} parent=0 // pred_fallthru
    _
  %v24 = vld [vmem:[%s0] sm:$0xff]
  %v25 = vld [vmem:[%s0 + $0x8] sm:$0xff]
  %v26 = vld [vmem:[%s0 + $0x10] sm:$0xff]
  %v27 = vld [vmem:[%s0 + $0x18] sm:$0xff]
  %v28 = vld [vmem:[%s0 + $0x20] sm:$0xff]
  %v29 = vld [vmem:[%s0 + $0x28] sm:$0xff]
  %v30 = vld [vmem:[%s0 + $0x30] sm:$0xff]
  %v31 = vld [vmem:[%s0 + $0x38] sm:$0xff]
  %v32 = vpack.c.bf16 %v24, %v24
  %v33 = vpack.c.bf16 %v25, %v25
  %v34 = vpack.c.bf16 %v26, %v26
  %v35 = vpack.c.bf16 %v27, %v27
  %v36 = vpack.c.bf16 %v28, %v28
  %v37 = vpack.c.bf16 %v29, %v29
  %v38 = vpack.c.bf16 %v30, %v30
  %v39 = vpack.c.bf16 %v31, %v31
  %v40 = vld [vmem:[%s1] sm:$0xf]
  %v41 = vld [vmem:[%s1 + $0x4] sm:$0xf]
  %v42 = vld [vmem:[%s1 + $0x8] sm:$0xf]
  %v43 = vld [vmem:[%s1 + $0xc] sm:$0xf]
  %v44 = vld [vmem:[%s1 + $0x10] sm:$0xf]
  %v45 = vld [vmem:[%s1 + $0x14] sm:$0xf]
  %v46 = vld [vmem:[%s1 + $0x18] sm:$0xf]
  %v47 = vld [vmem:[%s1 + $0x1c] sm:$0xf]
  %v48 = vld [vmem:[%s1 + $0x20] sm:$0xf]
  %v49 = vld [vmem:[%s1 + $0x24] sm:$0xf]
  %v50 = vld [vmem:[%s1 + $0x28] sm:$0xf]
  %v51 = vld [vmem:[%s1 + $0x2c] sm:$0xf]
  %v52 = vld [vmem:[%s1 + $0x30] sm:$0xf]
  %v53 = vld [vmem:[%s1 + $0x34] sm:$0xf]
  %v54 = vld [vmem:[%s1 + $0x38] sm:$0xf]
  %v55 = vld [vmem:[%s1 + $0x3c] sm:$0xf]
  %v56 = vld [vmem:[%s1 + $0x40] sm:$0xf]
  %v57 = vld [vmem:[%s1 + $0x44] sm:$0xf]
  %v58 = vld [vmem:[%s1 + $0x48] sm:$0xf]
  %v59 = vld [vmem:[%s1 + $0x4c] sm:$0xf]
  %v60 = vld [vmem:[%s1 + $0x50] sm:$0xf]
  %v61 = vld [vmem:[%s1 + $0x54] sm:$0xf]
  %v62 = vld [vmem:[%s1 + $0x58] sm:$0xf]
  %v63 = vld [vmem:[%s1 + $0x5c] sm:$0xf]
  %v64 = vld [vmem:[%s1 + $0x60] sm:$0xf]
  %v65 = vld [vmem:[%s1 + $0x64] sm:$0xf]
  %v66 = vld [vmem:[%s1 + $0x68] sm:$0xf]
  %v67 = vld [vmem:[%s1 + $0x6c] sm:$0xf]
  %v68 = vld [vmem:[%s1 + $0x70] sm:$0xf]
  %v69 = vld [vmem:[%s1 + $0x74] sm:$0xf]
  %v70 = vld [vmem:[%s1 + $0x78] sm:$0xf]
  %v71 = vld [vmem:[%s1 + $0x7c] sm:$0xf]
  %v72 = vld [vmem:[%s1 + $0x80] sm:$0xf]
  %v73 = vld [vmem:[%s1 + $0x84] sm:$0xf]
  %v74 = vld [vmem:[%s1 + $0x88] sm:$0xf]
  %v75 = vld [vmem:[%s1 + $0x8c] sm:$0xf]
  %v76 = vld [vmem:[%s1 + $0x90] sm:$0xf]
  %v77 = vld [vmem:[%s1 + $0x94] sm:$0xf]
  %v78 = vld [vmem:[%s1 + $0x98] sm:$0xf]
  %v79 = vld [vmem:[%s1 + $0x9c] sm:$0xf]
  %v80 = vld [vmem:[%s1 + $0xa0] sm:$0xf]
  %v81 = vld [vmem:[%s1 + $0xa4] sm:$0xf]
  %v82 = vld [vmem:[%s1 + $0xa8] sm:$0xf]
  %v83 = vld [vmem:[%s1 + $0xac] sm:$0xf]
  %v84 = vld [vmem:[%s1 + $0xb0] sm:$0xf]
  %v85 = vld [vmem:[%s1 + $0xb4] sm:$0xf]
  %v86 = vld [vmem:[%s1 + $0xb8] sm:$0xf]
  %v87 = vld [vmem:[%s1 + $0xbc] sm:$0xf]
  %v88 = vld [vmem:[%s1 + $0xc0] sm:$0xf]
  %v89 = vld [vmem:[%s1 + $0xc4] sm:$0xf]
  %v90 = vld [vmem:[%s1 + $0xc8] sm:$0xf]
  %v91 = vld [vmem:[%s1 + $0xcc] sm:$0xf]
  %v92 = vld [vmem:[%s1 + $0xd0] sm:$0xf]
  %v93 = vld [vmem:[%s1 + $0xd4] sm:$0xf]
  %v94 = vld [vmem:[%s1 + $0xd8] sm:$0xf]
  %v95 = vld [vmem:[%s1 + $0xdc] sm:$0xf]
  %v96 = vld [vmem:[%s1 + $0xe0] sm:$0xf]
  %v97 = vld [vmem:[%s1 + $0xe4] sm:$0xf]
  %v98 = vld [vmem:[%s1 + $0xe8] sm:$0xf]
  %v99 = vld [vmem:[%s1 + $0xec] sm:$0xf]
  %v100 = vld [vmem:[%s1 + $0xf0] sm:$0xf]
  %v101 = vld [vmem:[%s1 + $0xf4] sm:$0xf]
  %v102 = vld [vmem:[%s1 + $0xf8] sm:$0xf]
  %v103 = vld [vmem:[%s1 + $0xfc] sm:$0xf]
  %v104 = vld [vmem:[%s1 + $0x100] sm:$0xf]
  %v105 = vld [vmem:[%s1 + $0x104] sm:$0xf]
  %v106 = vld [vmem:[%s1 + $0x108] sm:$0xf]
  %v107 = vld [vmem:[%s1 + $0x10c] sm:$0xf]
  %v108 = vld [vmem:[%s1 + $0x110] sm:$0xf]
  %v109 = vld [vmem:[%s1 + $0x114] sm:$0xf]
  %v110 = vld [vmem:[%s1 + $0x118] sm:$0xf]
  %v111 = vld [vmem:[%s1 + $0x11c] sm:$0xf]
  %v112 = vld [vmem:[%s1 + $0x120] sm:$0xf]
  %v113 = vld [vmem:[%s1 + $0x124] sm:$0xf]
  %v114 = vld [vmem:[%s1 + $0x128] sm:$0xf]
  %v115 = vld [vmem:[%s1 + $0x12c] sm:$0xf]
  %v116 = vld [vmem:[%s1 + $0x130] sm:$0xf]
  %v117 = vld [vmem:[%s1 + $0x134] sm:$0xf]
  %v118 = vld [vmem:[%s1 + $0x138] sm:$0xf]
  %v119 = vld [vmem:[%s1 + $0x13c] sm:$0xf]
  %v120 = vld [vmem:[%s1 + $0x140] sm:$0xf]
  %v121 = vld [vmem:[%s1 + $0x144] sm:$0xf]
  %v122 = vld [vmem:[%s1 + $0x148] sm:$0xf]
  %v123 = vld [vmem:[%s1 + $0x14c] sm:$0xf]
  %v124 = vld [vmem:[%s1 + $0x150] sm:$0xf]
  %v125 = vld [vmem:[%s1 + $0x154] sm:$0xf]
  %v126 = vld [vmem:[%s1 + $0x158] sm:$0xf]
  %v127 = vld [vmem:[%s1 + $0x15c] sm:$0xf]
  %v128 = vld [vmem:[%s1 + $0x160] sm:$0xf]
  %v129 = vld [vmem:[%s1 + $0x164] sm:$0xf]
  %v130 = vld [vmem:[%s1 + $0x168] sm:$0xf]
  %v131 = vld [vmem:[%s1 + $0x16c] sm:$0xf]
  %v132 = vld [vmem:[%s1 + $0x170] sm:$0xf]
  %v133 = vld [vmem:[%s1 + $0x174] sm:$0xf]
  %v134 = vld [vmem:[%s1 + $0x178] sm:$0xf]
  %v135 = vld [vmem:[%s1 + $0x17c] sm:$0xf]
  %v136 = vld [vmem:[%s1 + $0x180] sm:$0xf]
  %v137 = vld [vmem:[%s1 + $0x184] sm:$0xf]
  %v138 = vld [vmem:[%s1 + $0x188] sm:$0xf]
  %v139 = vld [vmem:[%s1 + $0x18c] sm:$0xf]
  %v140 = vld [vmem:[%s1 + $0x190] sm:$0xf]
  %v141 = vld [vmem:[%s1 + $0x194] sm:$0xf]
  %v142 = vld [vmem:[%s1 + $0x198] sm:$0xf]
  %v143 = vld [vmem:[%s1 + $0x19c] sm:$0xf]
  %v144 = vld [vmem:[%s1 + $0x1a0] sm:$0xf]
  %v145 = vld [vmem:[%s1 + $0x1a4] sm:$0xf]
  %v146 = vld [vmem:[%s1 + $0x1a8] sm:$0xf]
  %v147 = vld [vmem:[%s1 + $0x1ac] sm:$0xf]
  %v148 = vld [vmem:[%s1 + $0x1b0] sm:$0xf]
  %v149 = vld [vmem:[%s1 + $0x1b4] sm:$0xf]
  %v150 = vld [vmem:[%s1 + $0x1b8] sm:$0xf]
  %v151 = vld [vmem:[%s1 + $0x1bc] sm:$0xf]
  %v152 = vld [vmem:[%s1 + $0x1c0] sm:$0xf]
  %v153 = vld [vmem:[%s1 + $0x1c4] sm:$0xf]
  %v154 = vld [vmem:[%s1 + $0x1c8] sm:$0xf]
  %v155 = vld [vmem:[%s1 + $0x1cc] sm:$0xf]
  %v156 = vld [vmem:[%s1 + $0x1d0] sm:$0xf]
  %v157 = vld [vmem:[%s1 + $0x1d4] sm:$0xf]
  %v158 = vld [vmem:[%s1 + $0x1d8] sm:$0xf]
  %v159 = vld [vmem:[%s1 + $0x1dc] sm:$0xf]
  %v160 = vld [vmem:[%s1 + $0x1e0] sm:$0xf]
  %v161 = vld [vmem:[%s1 + $0x1e4] sm:$0xf]
  %v162 = vld [vmem:[%s1 + $0x1e8] sm:$0xf]
  %v163 = vld [vmem:[%s1 + $0x1ec] sm:$0xf]
  %v164 = vld [vmem:[%s1 + $0x1f0] sm:$0xf]
  %v165 = vld [vmem:[%s1 + $0x1f4] sm:$0xf]
  %v166 = vld [vmem:[%s1 + $0x1f8] sm:$0xf]
  %v167 = vld [vmem:[%s1 + $0x1fc] sm:$0xf]
  %v168 = vld [vmem:[%s5] sm:$0x1]
  %v169 = vlaneseq
  %v170 = vshrl.u32 %v169, 7
  %v171 = vsub.s32 0, %v170
  %v172 = vrot.slane %v168, %v171
  %v301 = vunpack.c.l.b16 %v40
  %v302 = vunpack.c.l.b16 %v41
  %v303 = vunpack.c.l.b16 %v42
  %v304 = vunpack.c.l.b16 %v43
  %v305 = vunpack.c.l.b16 %v44
  %v306 = vunpack.c.l.b16 %v45
  %v307 = vunpack.c.l.b16 %v46
  %v308 = vunpack.c.l.b16 %v47
  %v309 = vunpack.c.l.b16 %v48
  %v310 = vunpack.c.l.b16 %v49
  %v311 = vunpack.c.l.b16 %v50
  %v312 = vunpack.c.l.b16 %v51
  %v313 = vunpack.c.l.b16 %v52
  %v314 = vunpack.c.l.b16 %v53
  %v315 = vunpack.c.l.b16 %v54
  %v316 = vunpack.c.l.b16 %v55
  %v317 = vunpack.c.l.b16 %v56
  %v318 = vunpack.c.l.b16 %v57
  %v319 = vunpack.c.l.b16 %v58
  %v320 = vunpack.c.l.b16 %v59
  %v321 = vunpack.c.l.b16 %v60
  %v322 = vunpack.c.l.b16 %v61
  %v323 = vunpack.c.l.b16 %v62
  %v324 = vunpack.c.l.b16 %v63
  %v325 = vunpack.c.l.b16 %v64
  %v326 = vunpack.c.l.b16 %v65
  %v327 = vunpack.c.l.b16 %v66
  %v328 = vunpack.c.l.b16 %v67
  %v329 = vunpack.c.l.b16 %v68
  %v330 = vunpack.c.l.b16 %v69
  %v331 = vunpack.c.l.b16 %v70
  %v332 = vunpack.c.l.b16 %v71
  %v333 = vunpack.c.l.b16 %v72
  %v334 = vunpack.c.l.b16 %v73
  %v335 = vunpack.c.l.b16 %v74
  %v336 = vunpack.c.l.b16 %v75
  %v337 = vunpack.c.l.b16 %v76
  %v338 = vunpack.c.l.b16 %v77
  %v339 = vunpack.c.l.b16 %v78
  %v340 = vunpack.c.l.b16 %v79
  %v341 = vunpack.c.l.b16 %v80
  %v342 = vunpack.c.l.b16 %v81
  %v343 = vunpack.c.l.b16 %v82
  %v344 = vunpack.c.l.b16 %v83
  %v345 = vunpack.c.l.b16 %v84
  %v346 = vunpack.c.l.b16 %v85
  %v347 = vunpack.c.l.b16 %v86
  %v348 = vunpack.c.l.b16 %v87
  %v349 = vunpack.c.l.b16 %v88
  %v350 = vunpack.c.l.b16 %v89
  %v351 = vunpack.c.l.b16 %v90
  %v352 = vunpack.c.l.b16 %v91
  %v353 = vunpack.c.l.b16 %v92
  %v354 = vunpack.c.l.b16 %v93
  %v355 = vunpack.c.l.b16 %v94
  %v356 = vunpack.c.l.b16 %v95
  %v357 = vunpack.c.l.b16 %v96
  %v358 = vunpack.c.l.b16 %v97
  %v359 = vunpack.c.l.b16 %v98
  %v360 = vunpack.c.l.b16 %v99
  %v361 = vunpack.c.l.b16 %v100
  %v362 = vunpack.c.l.b16 %v101
  %v363 = vunpack.c.l.b16 %v102
  %v364 = vunpack.c.l.b16 %v103
  %v365 = vunpack.c.l.b16 %v104
  %v366 = vunpack.c.l.b16 %v105
  %v367 = vunpack.c.l.b16 %v106
  %v368 = vunpack.c.l.b16 %v107
  %v369 = vunpack.c.l.b16 %v108
  %v370 = vunpack.c.l.b16 %v109
  %v371 = vunpack.c.l.b16 %v110
  %v372 = vunpack.c.l.b16 %v111
  %v373 = vunpack.c.l.b16 %v112
  %v374 = vunpack.c.l.b16 %v113
  %v375 = vunpack.c.l.b16 %v114
  %v376 = vunpack.c.l.b16 %v115
  %v377 = vunpack.c.l.b16 %v116
  %v378 = vunpack.c.l.b16 %v117
  %v379 = vunpack.c.l.b16 %v118
  %v380 = vunpack.c.l.b16 %v119
  %v381 = vunpack.c.l.b16 %v120
  %v382 = vunpack.c.l.b16 %v121
  %v383 = vunpack.c.l.b16 %v122
  %v384 = vunpack.c.l.b16 %v123
  %v385 = vunpack.c.l.b16 %v124
  %v386 = vunpack.c.l.b16 %v125
  %v387 = vunpack.c.l.b16 %v126
  %v388 = vunpack.c.l.b16 %v127
  %v389 = vunpack.c.l.b16 %v128
  %v390 = vunpack.c.l.b16 %v129
  %v391 = vunpack.c.l.b16 %v130
  %v392 = vunpack.c.l.b16 %v131
  %v393 = vunpack.c.l.b16 %v132
  %v394 = vunpack.c.l.b16 %v133
  %v395 = vunpack.c.l.b16 %v134
  %v396 = vunpack.c.l.b16 %v135
  %v397 = vunpack.c.l.b16 %v136
  %v398 = vunpack.c.l.b16 %v137
  %v399 = vunpack.c.l.b16 %v138
  %v400 = vunpack.c.l.b16 %v139
  %v401 = vunpack.c.l.b16 %v140
  %v402 = vunpack.c.l.b16 %v141
  %v403 = vunpack.c.l.b16 %v142
  %v404 = vunpack.c.l.b16 %v143
  %v405 = vunpack.c.l.b16 %v144
  %v406 = vunpack.c.l.b16 %v145
  %v407 = vunpack.c.l.b16 %v146
  %v408 = vunpack.c.l.b16 %v147
  %v409 = vunpack.c.l.b16 %v148
  %v410 = vunpack.c.l.b16 %v149
  %v411 = vunpack.c.l.b16 %v150
  %v412 = vunpack.c.l.b16 %v151
  %v413 = vunpack.c.l.b16 %v152
  %v414 = vunpack.c.l.b16 %v153
  %v415 = vunpack.c.l.b16 %v154
  %v416 = vunpack.c.l.b16 %v155
  %v417 = vunpack.c.l.b16 %v156
  %v418 = vunpack.c.l.b16 %v157
  %v419 = vunpack.c.l.b16 %v158
  %v420 = vunpack.c.l.b16 %v159
  %v421 = vunpack.c.l.b16 %v160
  %v422 = vunpack.c.l.b16 %v161
  %v423 = vunpack.c.l.b16 %v162
  %v424 = vunpack.c.l.b16 %v163
  %v425 = vunpack.c.l.b16 %v164
  %v426 = vunpack.c.l.b16 %v165
  %v427 = vunpack.c.l.b16 %v166
  %v428 = vunpack.c.l.b16 %v167
  %v429 = vpack.c.b16 %v302, %v301
  %v430 = vpack.c.b16 %v304, %v303
  %v431 = vpack.c.b16 %v306, %v305
  %v432 = vpack.c.b16 %v308, %v307
  %v433 = vpack.c.b16 %v310, %v309
  %v434 = vpack.c.b16 %v312, %v311
  %v435 = vpack.c.b16 %v314, %v313
  %v436 = vpack.c.b16 %v316, %v315
  %v437 = vpack.c.b16 %v318, %v317
  %v438 = vpack.c.b16 %v320, %v319
  %v439 = vpack.c.b16 %v322, %v321
  %v440 = vpack.c.b16 %v324, %v323
  %v441 = vpack.c.b16 %v326, %v325
  %v442 = vpack.c.b16 %v328, %v327
  %v443 = vpack.c.b16 %v330, %v329
  %v444 = vpack.c.b16 %v332, %v331
  %v445 = vpack.c.b16 %v334, %v333
  %v446 = vpack.c.b16 %v336, %v335
  %v447 = vpack.c.b16 %v338, %v337
  %v448 = vpack.c.b16 %v340, %v339
  %v449 = vpack.c.b16 %v342, %v341
  %v450 = vpack.c.b16 %v344, %v343
  %v451 = vpack.c.b16 %v346, %v345
  %v452 = vpack.c.b16 %v348, %v347
  %v453 = vpack.c.b16 %v350, %v349
  %v454 = vpack.c.b16 %v352, %v351
  %v455 = vpack.c.b16 %v354, %v353
  %v456 = vpack.c.b16 %v356, %v355
  %v457 = vpack.c.b16 %v358, %v357
  %v458 = vpack.c.b16 %v360, %v359
  %v459 = vpack.c.b16 %v362, %v361
  %v460 = vpack.c.b16 %v364, %v363
  %v461 = vpack.c.b16 %v366, %v365
  %v462 = vpack.c.b16 %v368, %v367
  %v463 = vpack.c.b16 %v370, %v369
  %v464 = vpack.c.b16 %v372, %v371
  %v465 = vpack.c.b16 %v374, %v373
  %v466 = vpack.c.b16 %v376, %v375
  %v467 = vpack.c.b16 %v378, %v377
  %v468 = vpack.c.b16 %v380, %v379
  %v469 = vpack.c.b16 %v382, %v381
  %v470 = vpack.c.b16 %v384, %v383
  %v471 = vpack.c.b16 %v386, %v385
  %v472 = vpack.c.b16 %v388, %v387
  %v473 = vpack.c.b16 %v390, %v389
  %v474 = vpack.c.b16 %v392, %v391
  %v475 = vpack.c.b16 %v394, %v393
  %v476 = vpack.c.b16 %v396, %v395
  %v477 = vpack.c.b16 %v398, %v397
  %v478 = vpack.c.b16 %v400, %v399
  %v479 = vpack.c.b16 %v402, %v401
  %v480 = vpack.c.b16 %v404, %v403
  %v481 = vpack.c.b16 %v406, %v405
  %v482 = vpack.c.b16 %v408, %v407
  %v483 = vpack.c.b16 %v410, %v409
  %v484 = vpack.c.b16 %v412, %v411
  %v485 = vpack.c.b16 %v414, %v413
  %v486 = vpack.c.b16 %v416, %v415
  %v487 = vpack.c.b16 %v418, %v417
  %v488 = vpack.c.b16 %v420, %v419
  %v489 = vpack.c.b16 %v422, %v421
  %v490 = vpack.c.b16 %v424, %v423
  %v491 = vpack.c.b16 %v426, %v425
  %v492 = vpack.c.b16 %v428, %v427
  %557 = vmatprep.subr.bf16.mxu0 0
  %558 = vmatpush1.bf16.msra.mxu0 %v429
  %559 = vmatprep.subr.bf16.mxu0 0
  %560 = vmatpush1.bf16.msra.mxu0 %v430
  %561 = vmatprep.subr.bf16.mxu0 0
  %562 = vmatpush1.bf16.msra.mxu0 %v431
  %563 = vmatprep.subr.bf16.mxu0 0
  %564 = vmatpush1.bf16.msra.mxu0 %v432
  %565 = vmatprep.subr.bf16.mxu0 0
  %566 = vmatpush1.bf16.msra.mxu0 %v433
  %567 = vmatprep.subr.bf16.mxu0 0
  %568 = vmatpush1.bf16.msra.mxu0 %v434
  %569 = vmatprep.subr.bf16.mxu0 0
  %570 = vmatpush1.bf16.msra.mxu0 %v435
  %571 = vmatprep.subr.bf16.mxu0 0
  %572 = vmatpush1.bf16.msra.mxu0 %v436
  %573 = vmatprep.subr.bf16.mxu0 0
  %574 = vmatpush1.bf16.msra.mxu0 %v437
  %575 = vmatprep.subr.bf16.mxu0 0
  %576 = vmatpush1.bf16.msra.mxu0 %v438
  %577 = vmatprep.subr.bf16.mxu0 0
  %578 = vmatpush1.bf16.msra.mxu0 %v439
  %579 = vmatprep.subr.bf16.mxu0 0
  %580 = vmatpush1.bf16.msra.mxu0 %v440
  %581 = vmatprep.subr.bf16.mxu0 0
  %582 = vmatpush1.bf16.msra.mxu0 %v441
  %583 = vmatprep.subr.bf16.mxu0 0
  %584 = vmatpush1.bf16.msra.mxu0 %v442
  %585 = vmatprep.subr.bf16.mxu0 0
  %586 = vmatpush1.bf16.msra.mxu0 %v443
  %587 = vmatprep.subr.bf16.mxu0 0
  %588 = vmatpush1.bf16.msra.mxu0 %v444
  %589 = vmatprep.mubr.bf16.mxu0 %v33
  %590 = vmatmul.mubr.bf16.gmra.mrb[0].mxu0 %v32
  %v591 = vpop.f32.mrb[0].mxu0
  %v592 = vadd.f32 %v172, %v591
  %v593 = vpop.f32.mrb[0].mxu0
  %v594 = vpop.f32.mrb[0].mxu0
  %v595 = vpop.f32.mrb[0].mxu0
  %596 = vdwg.mxu0
  %597 = vmatprep.subr.bf16.mxu0 0
  %598 = vmatpush1.bf16.msra.mxu0 %v445
  %599 = vmatprep.subr.bf16.mxu0 0
  %600 = vmatpush1.bf16.msra.mxu0 %v446
  %601 = vmatprep.subr.bf16.mxu0 0
  %602 = vmatpush1.bf16.msra.mxu0 %v447
  %603 = vmatprep.subr.bf16.mxu0 0
  %604 = vmatpush1.bf16.msra.mxu0 %v448
  %605 = vmatprep.subr.bf16.mxu0 0
  %606 = vmatpush1.bf16.msra.mxu0 %v449
  %607 = vmatprep.subr.bf16.mxu0 0
  %608 = vmatpush1.bf16.msra.mxu0 %v450
  %609 = vmatprep.subr.bf16.mxu0 0
  %610 = vmatpush1.bf16.msra.mxu0 %v451
  %611 = vmatprep.subr.bf16.mxu0 0
  %612 = vmatpush1.bf16.msra.mxu0 %v452
  %613 = vmatprep.subr.bf16.mxu0 0
  %614 = vmatpush1.bf16.msra.mxu0 %v453
  %615 = vmatprep.subr.bf16.mxu0 0
  %616 = vmatpush1.bf16.msra.mxu0 %v454
  %617 = vmatprep.subr.bf16.mxu0 0
  %618 = vmatpush1.bf16.msra.mxu0 %v455
  %619 = vmatprep.subr.bf16.mxu0 0
  %620 = vmatpush1.bf16.msra.mxu0 %v456
  %621 = vmatprep.subr.bf16.mxu0 0
  %622 = vmatpush1.bf16.msra.mxu0 %v457
  %623 = vmatprep.subr.bf16.mxu0 0
  %624 = vmatpush1.bf16.msra.mxu0 %v458
  %625 = vmatprep.subr.bf16.mxu0 0
  %626 = vmatpush1.bf16.msra.mxu0 %v459
  %627 = vmatprep.subr.bf16.mxu0 0
  %628 = vmatpush1.bf16.msra.mxu0 %v460
  %629 = vmatprep.mubr.bf16.mxu0 %v35
  %630 = vmatmul.mubr.bf16.gmra.mrb[0].mxu0 %v34
  %v631 = vpop.f32.mrb[0].mxu0
  %v632 = vadd.f32 %v592, %v631
  %v633 = vpop.f32.mrb[0].mxu0
  %v634 = vpop.f32.mrb[0].mxu0
  %v635 = vpop.f32.mrb[0].mxu0
  %636 = vdwg.mxu0
  %637 = vmatprep.subr.bf16.mxu0 0
  %638 = vmatpush1.bf16.msra.mxu0 %v461
  %639 = vmatprep.subr.bf16.mxu0 0
  %640 = vmatpush1.bf16.msra.mxu0 %v462
  %641 = vmatprep.subr.bf16.mxu0 0
  %642 = vmatpush1.bf16.msra.mxu0 %v463
  %643 = vmatprep.subr.bf16.mxu0 0
  %644 = vmatpush1.bf16.msra.mxu0 %v464
  %645 = vmatprep.subr.bf16.mxu0 0
  %646 = vmatpush1.bf16.msra.mxu0 %v465
  %647 = vmatprep.subr.bf16.mxu0 0
  %648 = vmatpush1.bf16.msra.mxu0 %v466
  %649 = vmatprep.subr.bf16.mxu0 0
  %650 = vmatpush1.bf16.msra.mxu0 %v467
  %651 = vmatprep.subr.bf16.mxu0 0
  %652 = vmatpush1.bf16.msra.mxu0 %v468
  %653 = vmatprep.subr.bf16.mxu0 0
  %654 = vmatpush1.bf16.msra.mxu0 %v469
  %655 = vmatprep.subr.bf16.mxu0 0
  %656 = vmatpush1.bf16.msra.mxu0 %v470
  %657 = vmatprep.subr.bf16.mxu0 0
  %658 = vmatpush1.bf16.msra.mxu0 %v471
  %659 = vmatprep.subr.bf16.mxu0 0
  %660 = vmatpush1.bf16.msra.mxu0 %v472
  %661 = vmatprep.subr.bf16.mxu0 0
  %662 = vmatpush1.bf16.msra.mxu0 %v473
  %663 = vmatprep.subr.bf16.mxu0 0
  %664 = vmatpush1.bf16.msra.mxu0 %v474
  %665 = vmatprep.subr.bf16.mxu0 0
  %666 = vmatpush1.bf16.msra.mxu0 %v475
  %667 = vmatprep.subr.bf16.mxu0 0
  %668 = vmatpush1.bf16.msra.mxu0 %v476
  %669 = vmatprep.mubr.bf16.mxu0 %v37
  %670 = vmatmul.mubr.bf16.gmra.mrb[0].mxu0 %v36
  %v671 = vpop.f32.mrb[0].mxu0
  %v672 = vadd.f32 %v632, %v671
  %v673 = vpop.f32.mrb[0].mxu0
  %v674 = vpop.f32.mrb[0].mxu0
  %v675 = vpop.f32.mrb[0].mxu0
  %676 = vdwg.mxu0
  %677 = vmatprep.subr.bf16.mxu0 0
  %678 = vmatpush1.bf16.msra.mxu0 %v477
  %679 = vmatprep.subr.bf16.mxu0 0
  %680 = vmatpush1.bf16.msra.mxu0 %v478
  %681 = vmatprep.subr.bf16.mxu0 0
  %682 = vmatpush1.bf16.msra.mxu0 %v479
  %683 = vmatprep.subr.bf16.mxu0 0
  %684 = vmatpush1.bf16.msra.mxu0 %v480
  %685 = vmatprep.subr.bf16.mxu0 0
  %686 = vmatpush1.bf16.msra.mxu0 %v481
  %687 = vmatprep.subr.bf16.mxu0 0
  %688 = vmatpush1.bf16.msra.mxu0 %v482
  %689 = vmatprep.subr.bf16.mxu0 0
  %690 = vmatpush1.bf16.msra.mxu0 %v483
  %691 = vmatprep.subr.bf16.mxu0 0
  %692 = vmatpush1.bf16.msra.mxu0 %v484
  %693 = vmatprep.subr.bf16.mxu0 0
  %694 = vmatpush1.bf16.msra.mxu0 %v485
  %695 = vmatprep.subr.bf16.mxu0 0
  %696 = vmatpush1.bf16.msra.mxu0 %v486
  %697 = vmatprep.subr.bf16.mxu0 0
  %698 = vmatpush1.bf16.msra.mxu0 %v487
  %699 = vmatprep.subr.bf16.mxu0 0
  %700 = vmatpush1.bf16.msra.mxu0 %v488
  %701 = vmatprep.subr.bf16.mxu0 0
  %702 = vmatpush1.bf16.msra.mxu0 %v489
  %703 = vmatprep.subr.bf16.mxu0 0
  %704 = vmatpush1.bf16.msra.mxu0 %v490
  %705 = vmatprep.subr.bf16.mxu0 0
  %706 = vmatpush1.bf16.msra.mxu0 %v491
  %707 = vmatprep.subr.bf16.mxu0 0
  %708 = vmatpush1.bf16.msra.mxu0 %v492
  %709 = vmatprep.mubr.bf16.mxu0 %v39
  %710 = vmatmul.mubr.bf16.gmra.mrb[0].mxu0 %v38
  %v711 = vpop.f32.mrb[0].mxu0
  %v712 = vadd.f32 %v672, %v711
  %v713 = vpop.f32.mrb[0].mxu0
  %v714 = vpop.f32.mrb[0].mxu0
  %v715 = vpop.f32.mrb[0].mxu0
  %716 = vdwg.mxu0
  %v717 = vmax.f32 %v712, 0.0
  %v718 = vpack.c.bf16 %v717, %v717
  %v719 = vld [vmem:[%s2] sm:$0xf]
  %v720 = vld [vmem:[%s2 + $0x4] sm:$0xf]
  %v721 = vld [vmem:[%s2 + $0x8] sm:$0xf]
  %v722 = vld [vmem:[%s2 + $0xc] sm:$0xf]
  %v723 = vld [vmem:[%s5 + $0x1] sm:$0x1]
  %v724 = vlaneseq
  %v725 = vshrl.u32 %v724, 7
  %v726 = vsub.s32 0, %v725
  %v727 = vrot.slane %v723, %v726
  %v732 = vunpack.c.l.b16 %v719
  %v733 = vunpack.c.l.b16 %v720
  %v734 = vunpack.c.l.b16 %v721
  %v735 = vunpack.c.l.b16 %v722
  %v736 = vpack.c.b16 %v733, %v732
  %v737 = vpack.c.b16 %v735, %v734
  %vm740 = vcmask 261120
  %v742 = vsel %vm740, %v718, 0
  %744 = vmatprep.subr.bf16.mxu0 0
  %745 = vmatpush1.bf16.msra.mxu0 %v736
  %746 = vmatprep.subr.bf16.mxu0 0
  %747 = vmatpush1.bf16.msra.mxu0 %v737
  %748 = vmatprep.subr.bf16.mxu0 0
  %749 = vmatpush1.bf16.msra.mxu0 0
  %750 = vmatprep.subr.bf16.mxu0 0
  %751 = vmatpush1.bf16.msra.mxu0 0
  %752 = vmatprep.subr.bf16.mxu0 0
  %753 = vmatpush1.bf16.msra.mxu0 0
  %754 = vmatprep.subr.bf16.mxu0 0
  %755 = vmatpush1.bf16.msra.mxu0 0
  %756 = vmatprep.subr.bf16.mxu0 0
  %757 = vmatpush1.bf16.msra.mxu0 0
  %758 = vmatprep.subr.bf16.mxu0 0
  %759 = vmatpush1.bf16.msra.mxu0 0
  %760 = vmatprep.subr.bf16.mxu0 0
  %761 = vmatpush1.bf16.msra.mxu0 0
  %762 = vmatprep.subr.bf16.mxu0 0
  %763 = vmatpush1.bf16.msra.mxu0 0
  %764 = vmatprep.subr.bf16.mxu0 0
  %765 = vmatpush1.bf16.msra.mxu0 0
  %766 = vmatprep.subr.bf16.mxu0 0
  %767 = vmatpush1.bf16.msra.mxu0 0
  %768 = vmatprep.subr.bf16.mxu0 0
  %769 = vmatpush1.bf16.msra.mxu0 0
  %770 = vmatprep.subr.bf16.mxu0 0
  %771 = vmatpush1.bf16.msra.mxu0 0
  %772 = vmatprep.subr.bf16.mxu0 0
  %773 = vmatpush1.bf16.msra.mxu0 0
  %774 = vmatprep.subr.bf16.mxu0 0
  %775 = vmatpush1.bf16.msra.mxu0 0
  %776 = vmatprep.mubr.bf16.mxu0 0
  %777 = vmatmul.mubr.bf16.gmra.mrb[0].mxu0 %v742
  %v778 = vpop.f32.mrb[0].mxu0
  %v779 = vadd.f32 %v727, %v778
  %v780 = vpop.f32.mrb[0].mxu0
  %v781 = vpop.f32.mrb[0].mxu0
  %v782 = vpop.f32.mrb[0].mxu0
  %783 = vdwg.mxu0
  %v784 = vmax.f32 %v779, 0.0
  %v785 = vpack.c.bf16 %v784, %v784
  %v786 = vld [vmem:[%s3] sm:$0xf]
  %v787 = vld [vmem:[%s3 + $0x4] sm:$0xf]
  %v788 = vld [vmem:[%s3 + $0x8] sm:$0xf]
  %v789 = vld [vmem:[%s3 + $0xc] sm:$0xf]
  %v790 = vld [vmem:[%s5 + $0x2] sm:$0x1]
  %v791 = vlaneseq
  %v792 = vshrl.u32 %v791, 7
  %v793 = vsub.s32 0, %v792
  %v794 = vrot.slane %v790, %v793
  %v799 = vunpack.c.l.b16 %v786
  %v800 = vunpack.c.l.b16 %v787
  %v801 = vunpack.c.l.b16 %v788
  %v802 = vunpack.c.l.b16 %v789
  %v803 = vpack.c.b16 %v800, %v799
  %v804 = vpack.c.b16 %v802, %v801
  %v808 = vsel %vm740, %v785, 0
  %810 = vmatprep.subr.bf16.mxu0 0
  %811 = vmatpush1.bf16.msra.mxu0 %v803
  %812 = vmatprep.subr.bf16.mxu0 0
  %813 = vmatpush1.bf16.msra.mxu0 %v804
  %814 = vmatprep.subr.bf16.mxu0 0
  %815 = vmatpush1.bf16.msra.mxu0 0
  %816 = vmatprep.subr.bf16.mxu0 0
  %817 = vmatpush1.bf16.msra.mxu0 0
  %818 = vmatprep.subr.bf16.mxu0 0
  %819 = vmatpush1.bf16.msra.mxu0 0
  %820 = vmatprep.subr.bf16.mxu0 0
  %821 = vmatpush1.bf16.msra.mxu0 0
  %822 = vmatprep.subr.bf16.mxu0 0
  %823 = vmatpush1.bf16.msra.mxu0 0
  %824 = vmatprep.subr.bf16.mxu0 0
  %825 = vmatpush1.bf16.msra.mxu0 0
  %826 = vmatprep.subr.bf16.mxu0 0
  %827 = vmatpush1.bf16.msra.mxu0 0
  %828 = vmatprep.subr.bf16.mxu0 0
  %829 = vmatpush1.bf16.msra.mxu0 0
  %830 = vmatprep.subr.bf16.mxu0 0
  %831 = vmatpush1.bf16.msra.mxu0 0
  %832 = vmatprep.subr.bf16.mxu0 0
  %833 = vmatpush1.bf16.msra.mxu0 0
  %834 = vmatprep.subr.bf16.mxu0 0
  %835 = vmatpush1.bf16.msra.mxu0 0
  %836 = vmatprep.subr.bf16.mxu0 0
  %837 = vmatpush1.bf16.msra.mxu0 0
  %838 = vmatprep.subr.bf16.mxu0 0
  %839 = vmatpush1.bf16.msra.mxu0 0
  %840 = vmatprep.subr.bf16.mxu0 0
  %841 = vmatpush1.bf16.msra.mxu0 0
  %842 = vmatprep.mubr.bf16.mxu0 0
  %843 = vmatmul.mubr.bf16.gmra.mrb[0].mxu0 %v808
  %v844 = vpop.f32.mrb[0].mxu0
  %v845 = vadd.f32 %v794, %v844
  %v846 = vpop.f32.mrb[0].mxu0
  %v847 = vpop.f32.mrb[0].mxu0
  %v848 = vpop.f32.mrb[0].mxu0
  %849 = vdwg.mxu0
  %v850 = vmax.f32 %v845, 0.0
  %v851 = vpack.c.bf16 %v850, %v850
  %v852 = vld [vmem:[%s4] sm:$0xf]
  %v853 = vld [vmem:[%s4 + $0x4] sm:$0xf]
  %v854 = vld [vmem:[%s4 + $0x8] sm:$0xf]
  %v855 = vld [vmem:[%s4 + $0xc] sm:$0xf]
  %v856 = vld [vmem:[%s5 + $0x3] sm:$0x1]
  %v857 = vlaneseq
  %v858 = vshrl.u32 %v857, 7
  %v859 = vsub.s32 0, %v858
  %v860 = vrot.slane %v856, %v859
  %v865 = vunpack.c.l.b16 %v852
  %v866 = vunpack.c.l.b16 %v853
  %v867 = vunpack.c.l.b16 %v854
  %v868 = vunpack.c.l.b16 %v855
  %v869 = vpack.c.b16 %v866, %v865
  %v870 = vpack.c.b16 %v868, %v867
  %v874 = vsel %vm740, %v851, 0
  %876 = vmatprep.subr.bf16.mxu0 0
  %877 = vmatpush1.bf16.msra.mxu0 %v869
  %878 = vmatprep.subr.bf16.mxu0 0
  %879 = vmatpush1.bf16.msra.mxu0 %v870
  %880 = vmatprep.subr.bf16.mxu0 0
  %881 = vmatpush1.bf16.msra.mxu0 0
  %882 = vmatprep.subr.bf16.mxu0 0
  %883 = vmatpush1.bf16.msra.mxu0 0
  %884 = vmatprep.subr.bf16.mxu0 0
  %885 = vmatpush1.bf16.msra.mxu0 0
  %886 = vmatprep.subr.bf16.mxu0 0
  %887 = vmatpush1.bf16.msra.mxu0 0
  %888 = vmatprep.subr.bf16.mxu0 0
  %889 = vmatpush1.bf16.msra.mxu0 0
  %890 = vmatprep.subr.bf16.mxu0 0
  %891 = vmatpush1.bf16.msra.mxu0 0
  %892 = vmatprep.subr.bf16.mxu0 0
  %893 = vmatpush1.bf16.msra.mxu0 0
  %894 = vmatprep.subr.bf16.mxu0 0
  %895 = vmatpush1.bf16.msra.mxu0 0
  %896 = vmatprep.subr.bf16.mxu0 0
  %897 = vmatpush1.bf16.msra.mxu0 0
  %898 = vmatprep.subr.bf16.mxu0 0
  %899 = vmatpush1.bf16.msra.mxu0 0
  %900 = vmatprep.subr.bf16.mxu0 0
  %901 = vmatpush1.bf16.msra.mxu0 0
  %902 = vmatprep.subr.bf16.mxu0 0
  %903 = vmatpush1.bf16.msra.mxu0 0
  %904 = vmatprep.subr.bf16.mxu0 0
  %905 = vmatpush1.bf16.msra.mxu0 0
  %906 = vmatprep.subr.bf16.mxu0 0
  %907 = vmatpush1.bf16.msra.mxu0 0
  %908 = vmatprep.mubr.bf16.mxu0 0
  %909 = vmatmul.mubr.bf16.gmra.mrb[0].mxu0 %v874
  %v910 = vpop.f32.mrb[0].mxu0
  %v911 = vadd.f32 %v860, %v910
  %v912 = vpop.f32.mrb[0].mxu0
  %v913 = vpop.f32.mrb[0].mxu0
  %v914 = vpop.f32.mrb[0].mxu0
  %915 = vdwg.mxu0
  %v916 = vpack.c.bf16 %v911, %v911
  %917 = vst [vmem:[%s6] sm:$0xf] %v916
  // Predicated region
  $region26: #{mlp_d_forward.1} parent=0 // pred_check
    _
  $region27: #{mlp_d_forward.1} parent=0 // pred_check_branch
    %919 = sbr.rel (0) target = $region29
  $region28: #{mlp_d_forward.1} parent=0 // pred_region
    _
  $region29: #{mlp_d_forward.1} parent=0 // pred_fallthru
    _
  // Predicated region
  $region30: #{mlp_d_forward.1} parent=0 // pred_check
    _
  $region31: #{mlp_d_forward.1} parent=0 // pred_check_branch
    %921 = sbr.rel (0) target = $region33
  $region32: #{mlp_d_forward.1} parent=0 // pred_region
    _
  $region33: #{mlp_d_forward.1} parent=0 // pred_fallthru
    _

</llo_original>
